<compile_context>
chip_gen: v7x
topology: tpu7x:2x2x1
jax: 0.10.0
libtpu: 0.0.40
codegen_flags: <defaults>
</compile_context>

<pallas_src>
import math

import jax
import jax.numpy as jnp
from jax.experimental import pallas as pl
from jax.experimental.pallas import tpu as pltpu


_LANE = 128
_NEG_BIG = -1e30  # additive pad mask; exp underflows to exactly 0


def _proportion_kernel(inv_temp_ref, x_ref, w_ref, bias_ref, probs_ref, psum_ref):
    """One batch tile: logits -> masked softmax -> probs + partial column sums.

    inv_temp_ref: (1, 1)      f32 in SMEM   (1 / temperature)
    x_ref:        (TB, D)     matmul dtype  (bf16 by default)
    w_ref:        (D, Npad)   matmul dtype, pre-transposed lane-dense weight
    bias_ref:     (1, Npad)   f32 additive pad mask (0 valid / -1e30 pad)
    probs_ref:    (TB, Npad)  f32
    psum_ref:     (1, 1, Npad) f32 per-tile column sums of probs
    """
    inv_t = inv_temp_ref[0, 0]

    # Canonical (M,K)x(K,N) MXU matmul; accumulate in f32.
    logits = jnp.dot(x_ref[...], w_ref[...], preferred_element_type=jnp.float32)
    logits = logits * inv_t + bias_ref[...]          # temperature scale + pad mask

    # Row softmax in f32 with exact normalization.
    m = jnp.max(logits, axis=1, keepdims=True)
    e = jnp.exp(logits - m)
    denom = jnp.sum(e, axis=1, keepdims=True)
    probs = e / denom

    probs_ref[...] = probs.astype(probs_ref.dtype)
    psum_ref[0] = jnp.sum(probs, axis=0, keepdims=True)


def prepare_projector_weight(weight, matmul_dtype=jnp.bfloat16):
    """One-time weight preparation (hoisted out of the per-call hot path).

    weight: (N, D) float Linear weight in native PyTorch layout.
    Returns:
      w_t:       (D, Npad) matmul_dtype — transposed + lane-padded RHS.
      mask_bias: (1, Npad) f32 — 0 for valid classes, -1e30 for pad columns.
    """
    n, d = weight.shape
    n_pad = ((n + _LANE - 1) // _LANE) * _LANE
    w_t = jnp.zeros((d, n_pad), matmul_dtype)
    w_t = w_t.at[:, :n].set(weight.T.astype(matmul_dtype))
    mask_bias = jnp.where(jnp.arange(n_pad) < n, 0.0, _NEG_BIG)
    mask_bias = mask_bias.astype(jnp.float32).reshape(1, n_pad)
    return w_t, mask_bias


def _pick_block_b(batch, target):
    """Largest batch tile <= target that divides batch, preferring multiples of 8."""
    target = max(int(target), 1)
    if batch <= target:
        return batch
    fallback = None
    for tb in range(target, 0, -1):
        if batch % tb == 0:
            if tb % 8 == 0:
                return tb
            if fallback is None:
                fallback = tb
    # No nice divisor below target: fall back to the full batch (always legal).
    return fallback if (fallback is not None and fallback >= 8) else batch


def proportion_calculator(x, w_t, mask_bias, *, num_classes, temperature=1.0,
                          block_b=512):
    """Soft-mode ProportionCalculator forward.

    Args:
      x:          (B, D) input features (any float dtype; cast to w_t.dtype).
      w_t:        (D, Npad) prepared weight from prepare_projector_weight().
      mask_bias:  (1, Npad) prepared pad-mask bias.
      num_classes: N (valid output columns).
    Returns:
      (batch_proportions (N,), probs (B, N)) in float32.
    """
    b, d = x.shape
    d2, n_pad = w_t.shape
    assert d == d2, "x feature dim must match prepared weight"
    assert num_classes <= n_pad

    x_mm = x.astype(w_t.dtype)
    inv_t = jnp.full((1, 1), 1.0 / float(temperature), dtype=jnp.float32)

    tb = _pick_block_b(b, block_b)
    grid_b = b // tb
    in_itemsize = jnp.dtype(w_t.dtype).itemsize

    # Double-buffered x / probs tiles + resident weight, with headroom; clamp to
    # a value that is legal on every generation (v7x physical VMEM = 64 MiB).
    vmem_bytes = (2 * tb * d * in_itemsize          # x tiles (double-buffered)
                  + 2 * d * n_pad * in_itemsize     # weight
                  + 2 * tb * n_pad * 4              # probs tiles
                  + 4 * n_pad * 4                   # bias + partial sums
                  + (2 << 20))                      # slack
    vmem_limit = int(min(64 << 20, max(2 * vmem_bytes, 16 << 20)))

    cost = pl.CostEstimate(
        flops=2 * b * d * n_pad,
        transcendentals=b * n_pad,
        bytes_accessed=(b * d * in_itemsize + d * n_pad * in_itemsize
                        + n_pad * 4 + b * n_pad * 4 + grid_b * n_pad * 4),
    )

    probs_p, psums = pl.pallas_call(
        _proportion_kernel,
        grid=(grid_b,),
        in_specs=[
            pl.BlockSpec(memory_space=pltpu.MemorySpace.SMEM),       # 1/temperature
            pl.BlockSpec((tb, d), lambda i: (i, 0)),                 # x batch tile
            pl.BlockSpec((d, n_pad), lambda i: (0, 0)),              # weight (resident)
            pl.BlockSpec((1, n_pad), lambda i: (0, 0)),              # pad-mask bias
        ],
        out_specs=(
            pl.BlockSpec((tb, n_pad), lambda i: (i, 0)),             # probs tile
            pl.BlockSpec((1, 1, n_pad), lambda i: (i, 0, 0)),        # per-tile col sums
        ),
        out_shape=(
            jax.ShapeDtypeStruct((b, n_pad), jnp.float32),
            jax.ShapeDtypeStruct((grid_b, 1, n_pad), jnp.float32),
        ),
        compiler_params=pltpu.CompilerParams(
            dimension_semantics=("parallel",),
            vmem_limit_bytes=vmem_limit,
        ),
        cost_estimate=cost,
    )(inv_t, x_mm, w_t, mask_bias)

    batch_proportions = jnp.sum(psums, axis=(0, 1))[:num_classes] / b
    return batch_proportions, probs_p[:, :num_classes]


def init_projector_weight(key, input_dim, output_dim):
    # kaiming_normal_(weight, mode='fan_out', nonlinearity='relu') on an
    # (output_dim, input_dim) Linear weight: fan_out = output_dim, gain = sqrt(2).
    std = math.sqrt(2.0 / output_dim)
    return jax.random.normal(key, (output_dim, input_dim), dtype=jnp.float32) * std


if __name__ == "__main__":
    # Small shapes consistent with the module: (batch, input_dim) -> (batch, output_dim)
    B, D, N = 128, 256, 10
    temperature = 1.0

    key = jax.random.PRNGKey(0)
    kx, kw = jax.random.split(key)
    x = jax.random.normal(kx, (B, D), dtype=jnp.float32)
    weight = init_projector_weight(kw, D, N)            # native PyTorch (N, D) layout

    # One-time weight preparation (transpose + lane pad + bf16 cast), hoisted out
    # of the per-call path.
    w_t, mask_bias = prepare_projector_weight(weight, matmul_dtype=jnp.bfloat16)

    batch_proportions, probs = proportion_calculator(
        x, w_t, mask_bias, num_classes=N, temperature=temperature, block_b=64)
    jax.block_until_ready((batch_proportions, probs))

    # Reference with the same mixed-precision contract as the kernel:
    # bf16 matmul operands, f32 accumulation (HIGHEST precision), exact f32 softmax.
    x_op = x.astype(jnp.bfloat16).astype(jnp.float32)
    w_op = weight.astype(jnp.bfloat16).astype(jnp.float32)
    logits_ref = jnp.dot(x_op, w_op.T, precision=jax.lax.Precision.HIGHEST)
    probs_ref = jax.nn.softmax(logits_ref / temperature, axis=1)
    props_ref = jnp.mean(probs_ref, axis=0)

    assert probs.shape == (B, N) and batch_proportions.shape == (N,)
    assert bool(jnp.allclose(probs, probs_ref, atol=2e-3, rtol=2e-3))
    assert bool(jnp.allclose(batch_proportions, props_ref, atol=2e-3, rtol=2e-3))
    # Rows sum to 1 despite lane padding (exact-divide normalization).
    assert bool(jnp.allclose(jnp.sum(probs, axis=1), jnp.ones((B,)), atol=1e-3))
    print("KERNEL_OK")
</pallas_src>

<mosaic_0001>
module attributes {stable_mosaic.version = 11 : i64} {
  func.func @_proportion_kernel(%arg0: i32, %arg1: memref<1x1xf32, #tpu.memory_space<smem>>, %arg2: memref<64x256xbf16, #tpu.memory_space<vmem>>, %arg3: memref<256x128xbf16, #tpu.memory_space<vmem>>, %arg4: memref<1x128xf32, #tpu.memory_space<vmem>>, %arg5: memref<64x128xf32, #tpu.memory_space<vmem>>, %arg6: memref<1x1x128xf32, #tpu.memory_space<vmem>>) attributes {dimension_semantics = [#tpu.dimension_semantics<parallel>], iteration_bounds = array<i64: 2>, scalar_prefetch = 0 : i64, scratch_operands = 0 : i64, tpu.core_type = #tpu.core_type<tc>, window_params = [{transform_indices = @transform_0, window_bounds = array<i64: 1, 1>}, {transform_indices = @transform_1, window_bounds = array<i64: 64, 256>}, {pipeline_mode = #tpu.pipeline_mode<synchronous>, transform_indices = @transform_2, window_bounds = array<i64: 256, 128>}, {pipeline_mode = #tpu.pipeline_mode<synchronous>, transform_indices = @transform_3, window_bounds = array<i64: 1, 128>}, {transform_indices = @transform_4, window_bounds = array<i64: 64, 128>}, {transform_indices = @transform_5, window_bounds = array<i64: 1, 1, 128>}]} {
    %c0 = arith.constant 0 : index
    %c0_0 = arith.constant 0 : index
    %0 = memref.load %arg1[%c0, %c0_0] : memref<1x1xf32, #tpu.memory_space<smem>>
    %c0_1 = arith.constant 0 : index
    %c0_2 = arith.constant 0 : index
    %1 = vector.load %arg2[%c0_1, %c0_2] : memref<64x256xbf16, #tpu.memory_space<vmem>>, vector<64x256xbf16>
    %c0_3 = arith.constant 0 : index
    %c0_4 = arith.constant 0 : index
    %2 = vector.load %arg3[%c0_3, %c0_4] : memref<256x128xbf16, #tpu.memory_space<vmem>>, vector<256x128xbf16>
    %cst = arith.constant dense<0.000000e+00> : vector<64x128xf32>
    %3 = tpu.matmul %1, %2, %cst {dimension_numbers = #tpu.dot_dimension_numbers<[1], [0], [0], [1], [0, 0, 1, 1], [], []>} : vector<64x256xbf16>, vector<256x128xbf16>, vector<64x128xf32> -> vector<64x128xf32>
    %4 = vector.broadcast %0 : f32 to vector<64x128xf32>
    %5 = arith.mulf %3, %4 : vector<64x128xf32>
    %c0_5 = arith.constant 0 : index
    %c0_6 = arith.constant 0 : index
    %6 = vector.load %arg4[%c0_5, %c0_6] : memref<1x128xf32, #tpu.memory_space<vmem>>, vector<1x128xf32>
    %7 = vector.broadcast %6 : vector<1x128xf32> to vector<64x128xf32>
    %8 = arith.addf %5, %7 : vector<64x128xf32>
    %cst_7 = arith.constant dense<0xFF800000> : vector<64xf32>
    %9 = vector.multi_reduction <maximumf>, %8, %cst_7 [1] : vector<64x128xf32> to vector<64xf32>
    %10 = vector.shape_cast %9 : vector<64xf32> to vector<64x1xf32>
    %11 = vector.broadcast %10 : vector<64x1xf32> to vector<64x128xf32>
    %12 = arith.subf %8, %11 : vector<64x128xf32>
    %13 = math.exp %12 : vector<64x128xf32>
    %cst_8 = arith.constant dense<0.000000e+00> : vector<64xf32>
    %14 = vector.multi_reduction <add>, %13, %cst_8 [1] : vector<64x128xf32> to vector<64xf32>
    %15 = vector.shape_cast %14 : vector<64xf32> to vector<64x1xf32>
    %16 = vector.broadcast %15 : vector<64x1xf32> to vector<64x128xf32>
    %17 = arith.divf %13, %16 : vector<64x128xf32>
    %c0_9 = arith.constant 0 : index
    %c0_10 = arith.constant 0 : index
    %18 = vector.load %arg5[%c0_9, %c0_10] : memref<64x128xf32, #tpu.memory_space<vmem>>, vector<64x128xf32>
    tpu.vector_store %arg5[%c0_9, %c0_10], %17 {strides = array<i32>} : memref<64x128xf32, #tpu.memory_space<vmem>>, vector<64x128xf32>,
    %cst_11 = arith.constant dense<0.000000e+00> : vector<128xf32>
    %19 = vector.multi_reduction <add>, %17, %cst_11 [0] : vector<64x128xf32> to vector<128xf32>
    %20 = vector.shape_cast %19 : vector<128xf32> to vector<1x128xf32>
    %c0_12 = arith.constant 0 : index
    %c0_13 = arith.constant 0 : index
    %c0_14 = arith.constant 0 : index
    %21 = vector.load %arg6[%c0_12, %c0_13, %c0_14] : memref<1x1x128xf32, #tpu.memory_space<vmem>>, vector<1x1x128xf32>
    %22 = vector.shape_cast %21 : vector<1x1x128xf32> to vector<1x128xf32>
    %23 = vector.shape_cast %20 : vector<1x128xf32> to vector<1x1x128xf32>
    tpu.vector_store %arg6[%c0_12, %c0_13, %c0_14], %23 {strides = array<i32>} : memref<1x1x128xf32, #tpu.memory_space<vmem>>, vector<1x1x128xf32>,
    return
  }
  func.func @transform_0(%arg0: i32) -> (i32, i32) {
    %c0_i32 = arith.constant 0 : i32
    %c0_i32_0 = arith.constant 0 : i32
    %c0_i32_1 = arith.constant 0 : i32
    return %c0_i32, %c0_i32_0 : i32, i32
  }
  func.func @transform_1(%arg0: i32) -> (i32, i32) {
    %c0_i32 = arith.constant 0 : i32
    %c0_i32_0 = arith.constant 0 : i32
    return %arg0, %c0_i32 : i32, i32
  }
  func.func @transform_2(%arg0: i32) -> (i32, i32) {
    %c0_i32 = arith.constant 0 : i32
    %c0_i32_0 = arith.constant 0 : i32
    %c0_i32_1 = arith.constant 0 : i32
    return %c0_i32, %c0_i32_0 : i32, i32
  }
  func.func @transform_3(%arg0: i32) -> (i32, i32) {
    %c0_i32 = arith.constant 0 : i32
    %c0_i32_0 = arith.constant 0 : i32
    %c0_i32_1 = arith.constant 0 : i32
    return %c0_i32, %c0_i32_0 : i32, i32
  }
  func.func @transform_4(%arg0: i32) -> (i32, i32) {
    %c0_i32 = arith.constant 0 : i32
    %c0_i32_0 = arith.constant 0 : i32
    return %arg0, %c0_i32 : i32, i32
  }
  func.func @transform_5(%arg0: i32) -> (i32, i32, i32) {
    %c0_i32 = arith.constant 0 : i32
    %c0_i32_0 = arith.constant 0 : i32
    %c0_i32_1 = arith.constant 0 : i32
    return %arg0, %c0_i32, %c0_i32_0 : i32, i32, i32
  }
}

</mosaic_0001>

<llo_original>
// kernel: tpu_custom_call.1
$region0: #{tpu_custom_call.1}
  #allocation0 [shape = 'u32[]', space=smem, size = 0x4, offset = 0x4, fixed_abs, tag = 'smem constant byte address 0x4 - core index']
  #allocation1 [shape = 'u32[144,128]{1,0:T(1,128)}', space=vmem, size = 0x12000, scoped, tag = 'internal scratch']
  #allocation2 [shape = 'f32[1,1]{1,0:T(1,128)S(6)}', space=smem, size = 0x200, scoped, tag = 'scoped memory for tpu_custom_call.1']
  %s0 = inlined_call_operand.<no memory space> [shape: f32[1,1], index: 0, kind: input, shape index: {}]
  %s1 = inlined_call_operand.hbm [shape: bf16[128,256], index: 1, kind: input, shape index: {}]
  %s2 = inlined_call_operand.hbm [shape: bf16[256,128], index: 2, kind: input, shape index: {}]
  %s3 = inlined_call_operand.vmem [shape: f32[1,128], index: 3, kind: input, shape index: {}]
  %s4 = inlined_call_operand.hbm [shape: f32[128,128], index: 4, kind: output, shape index: {0}]
  %s5 = inlined_call_operand.hbm [shape: f32[2,1,128], index: 5, kind: output, shape index: {1}]
  %6 = xla_tuple %s4, %s5
  %s7 = sld [smem:[#allocation0]]
  $region65: #{tpu_custom_call.1} parent=0
    _
  %s9 = ssub.s32 1, %s7
  %s10 = scalar_select 0, %s9, %s7
  %11 = sst [smem:[#allocation2]] %s0
  $region1: #{tpu_custom_call.1} parent=0
    #allocation3 [shape = 'u8[65536]{0}', space=vmem, size = 0x10000, scoped, tag = 'input window, operand 1']
    #allocation4 [shape = 's32[2]{0}', space=sflag, size = 0x8, scoped, tag = 'scoped memory for tpu_custom_call.1']
    #allocation5 [shape = 's32[2]{0}', space=sflag, size = 0x8, scoped, tag = 'scoped memory for tpu_custom_call.1']
    #allocation6 [shape = 'u8[65536]{0}', space=vmem, size = 0x10000, scoped, tag = 'input window, operand 2, single buffered']
    #allocation7 [shape = 's32[1]{0}', space=sflag, size = 0x4, scoped, tag = 'scoped memory for tpu_custom_call.1']
    #allocation8 [shape = 'u8[65536]{0}', space=vmem, size = 0x10000, scoped, tag = 'output window, operand 0']
    #allocation9 [shape = 'u8[1024]{0}', space=vmem, size = 0x400, scoped, tag = 'output window, operand 1']
    #allocation10 [shape = 's32[2]{0}', space=sflag, size = 0x8, scoped, tag = 'scoped memory for tpu_custom_call.1']
    %12 = vsyncpa [#allocation4], 0
    %s13 = scalar_lea.sflag [#allocation4], 1
    %14 = vsyncpa %s13, 0
    %15 = vsyncpa [#allocation7], 0
    %16 = vsyncpa [#allocation5], 0
    %s17 = scalar_lea.sflag [#allocation5], 1
    %18 = vsyncpa %s17, 0
    %19 = vsyncpa [#allocation10], 0
    %s20 = scalar_lea.sflag [#allocation10], 1
    %21 = vsyncpa %s20, 0
    loop: start=0, step=1, limit=4
    $region2: #{tpu_custom_call.1} parent=1 // loop_pre_header
      _
    $region3: #{tpu_custom_call.1} parent=1 // loop_header
      %s23 = sphi 0, %s27
      %p24 = scmp.ge.s32.totalorder %s23, 4
      %s31 = sphi 0, %s31
      %s33 = sphi 0, %s31
      %s34 = sphi 0, %s33
      %s48 = sphi 0, %s34
      %s54 = sphi 0, %s56
      %s57 = sphi 0, %s54
      %s58 = sphi 0, %s57
      %s74 = sphi 0, %s58
      %s78 = sphi 0, %s78
      %s80 = sphi 0, %s78
      %s81 = sphi 0, %s80
      %s95 = sphi 0, %s81
      %s99 = sphi 0, %s99
      %s101 = sphi 0, %s99
      %s102 = sphi 0, %s101
      %s116 = sphi 0, %s102
      %s122 = sphi 0, %s124
      %s125 = sphi 0, %s122
      %s126 = sphi 0, %s125
      %s142 = sphi 0, %s126
      %s148 = sphi 0, %s150
      %s151 = sphi 0, %s148
      %s152 = sphi 0, %s151
      %s168 = sphi 0, %s152
    $region4: #{tpu_custom_call.1} parent=1 // loop_header_branch
      %26 = sbr.rel (%p24) target = $region8
    $region5: #{tpu_custom_call.1} parent=1 // loop_body
      %s28 = ssub.s32 %s23, 1
      %s29 = ssub.s32 %s23, 2
      %s30 = sadd.s32 %s23, 1
      %s32 = sadd.s32 %s31, 1
      %p35 = scmp.eq.s32.totalorder %s23, 1
      %p36 = scmp.ne.s32.totalorder %s31, %s33
      %p37 = scmp.eq.s32.totalorder %s23, 0
      %p38 = por %p36, %p37
      %p39 = scmp.ne.s32.totalorder %s31, %s33
      %p40 = scmp.eq.s32.totalorder %s28, 1
      %p41 = por %p39, %p40
      %p42 = scmp.ne.s32.totalorder %s33, %s34
      %p43 = scmp.eq.s32.totalorder %s28, 0
      %p44 = por %p42, %p43
      %p45 = scmp.ne.s32.totalorder %s33, %s34
      %p46 = scmp.eq.s32.totalorder %s29, 1
      %p47 = por %p45, %p46
      %p49 = scmp.ne.s32.totalorder %s34, %s48
      %p50 = scmp.eq.s32.totalorder %s29, 0
      %p51 = por %p49, %p50
      %s52 = ssub.s32 %s23, %s30
      %p53 = scmp.eq.s32.totalorder %s52, 0
      %s55 = sadd.s32 %s54, 1
      %s56 = scalar_select %p53, %s54, %s55
      %p59 = pneg %p53
      %p60 = scmp.eq.s32.totalorder %s23, 1
      %p61 = por %p59, %p60
      %p62 = scmp.ne.s32.totalorder %s54, %s57
      %p63 = scmp.eq.s32.totalorder %s23, 0
      %p64 = por %p62, %p63
      %p65 = scmp.ne.s32.totalorder %s54, %s57
      %p66 = scmp.eq.s32.totalorder %s28, 1
      %p67 = por %p65, %p66
      %p68 = scmp.ne.s32.totalorder %s57, %s58
      %p69 = scmp.eq.s32.totalorder %s28, 0
      %p70 = por %p68, %p69
      %p71 = scmp.ne.s32.totalorder %s57, %s58
      %p72 = scmp.eq.s32.totalorder %s29, 1
      %p73 = por %p71, %p72
      %p75 = scmp.ne.s32.totalorder %s58, %s74
      %p76 = scmp.eq.s32.totalorder %s29, 0
      %p77 = por %p75, %p76
      %s79 = sadd.s32 %s78, 1
      %p82 = scmp.eq.s32.totalorder %s23, 1
      %p83 = scmp.ne.s32.totalorder %s78, %s80
      %p84 = scmp.eq.s32.totalorder %s23, 0
      %p85 = por %p83, %p84
      %p86 = scmp.ne.s32.totalorder %s78, %s80
      %p87 = scmp.eq.s32.totalorder %s28, 1
      %p88 = por %p86, %p87
      %p89 = scmp.ne.s32.totalorder %s80, %s81
      %p90 = scmp.eq.s32.totalorder %s28, 0
      %p91 = por %p89, %p90
      %p92 = scmp.ne.s32.totalorder %s80, %s81
      %p93 = scmp.eq.s32.totalorder %s29, 1
      %p94 = por %p92, %p93
      %p96 = scmp.ne.s32.totalorder %s81, %s95
      %p97 = scmp.eq.s32.totalorder %s29, 0
      %p98 = por %p96, %p97
      %s100 = sadd.s32 %s99, 1
      %p103 = scmp.eq.s32.totalorder %s23, 1
      %p104 = scmp.ne.s32.totalorder %s99, %s101
      %p105 = scmp.eq.s32.totalorder %s23, 0
      %p106 = por %p104, %p105
      %p107 = scmp.ne.s32.totalorder %s99, %s101
      %p108 = scmp.eq.s32.totalorder %s28, 1
      %p109 = por %p107, %p108
      %p110 = scmp.ne.s32.totalorder %s101, %s102
      %p111 = scmp.eq.s32.totalorder %s28, 0
      %p112 = por %p110, %p111
      %p113 = scmp.ne.s32.totalorder %s101, %s102
      %p114 = scmp.eq.s32.totalorder %s29, 1
      %p115 = por %p113, %p114
      %p117 = scmp.ne.s32.totalorder %s102, %s116
      %p118 = scmp.eq.s32.totalorder %s29, 0
      %p119 = por %p117, %p118
      %s120 = ssub.s32 %s23, %s30
      %p121 = scmp.eq.s32.totalorder %s120, 0
      %s123 = sadd.s32 %s122, 1
      %s124 = scalar_select %p121, %s122, %s123
      %p127 = pneg %p121
      %p128 = scmp.eq.s32.totalorder %s23, 1
      %p129 = por %p127, %p128
      %p130 = scmp.ne.s32.totalorder %s122, %s125
      %p131 = scmp.eq.s32.totalorder %s23, 0
      %p132 = por %p130, %p131
      %p133 = scmp.ne.s32.totalorder %s122, %s125
      %p134 = scmp.eq.s32.totalorder %s28, 1
      %p135 = por %p133, %p134
      %p136 = scmp.ne.s32.totalorder %s125, %s126
      %p137 = scmp.eq.s32.totalorder %s28, 0
      %p138 = por %p136, %p137
      %p139 = scmp.ne.s32.totalorder %s125, %s126
      %p140 = scmp.eq.s32.totalorder %s29, 1
      %p141 = por %p139, %p140
      %p143 = scmp.ne.s32.totalorder %s126, %s142
      %p144 = scmp.eq.s32.totalorder %s29, 0
      %p145 = por %p143, %p144
      %s146 = ssub.s32 %s23, %s30
      %p147 = scmp.eq.s32.totalorder %s146, 0
      %s149 = sadd.s32 %s148, 1
      %s150 = scalar_select %p147, %s148, %s149
      %p153 = pneg %p147
      %p154 = scmp.eq.s32.totalorder %s23, 1
      %p155 = por %p153, %p154
      %p156 = scmp.ne.s32.totalorder %s148, %s151
      %p157 = scmp.eq.s32.totalorder %s23, 0
      %p158 = por %p156, %p157
      %p159 = scmp.ne.s32.totalorder %s148, %s151
      %p160 = scmp.eq.s32.totalorder %s28, 1
      %p161 = por %p159, %p160
      %p162 = scmp.ne.s32.totalorder %s151, %s152
      %p163 = scmp.eq.s32.totalorder %s28, 0
      %p164 = por %p162, %p163
      %p165 = scmp.ne.s32.totalorder %s151, %s152
      %p166 = scmp.eq.s32.totalorder %s29, 1
      %p167 = por %p165, %p166
      %p169 = scmp.ne.s32.totalorder %s152, %s168
      %p170 = scmp.eq.s32.totalorder %s29, 0
      %p171 = por %p169, %p170
      %p172 = scmp.le.s32.totalorder 1, %s23
      %p173 = scmp.lt.s32.totalorder %s23, 3
      %p174 = pnand %p172, %p173
      %p175 = pneg %p174
      // Predicated region
      $region9: #{tpu_custom_call.1} parent=5 // pred_check
        _
      $region10: #{tpu_custom_call.1} parent=5 // pred_check_branch
        %177 = sbr.rel (%p174) target = $region12
      $region11: #{tpu_custom_call.1} parent=5 // pred_region
        %s178 = ssub.s32 %s23, 1
        // Predicated region
        $region13: #{tpu_custom_call.1} parent=11 // pred_check
          %p179 = pneg %p44
        $region14: #{tpu_custom_call.1} parent=11 // pred_check_branch
          %181 = sbr.rel (%p179) target = $region16
        $region15: #{tpu_custom_call.1} parent=11 // pred_region
          _
        $region16: #{tpu_custom_call.1} parent=11 // pred_fallthru
          _
        // Predicated region
        $region17: #{tpu_custom_call.1} parent=11 // pred_check
          %p182 = pneg %p91
        $region18: #{tpu_custom_call.1} parent=11 // pred_check_branch
          %184 = sbr.rel (%p182) target = $region20
        $region19: #{tpu_custom_call.1} parent=11 // pred_region
          %s186 = ssub.s32 2048, 2048
          %187 = vsyncadd [#allocation7], %s186
          %s188 = sshll.u32 [#allocation6], 4
          %s189 = int_to_ptr.vmem [resolvable:$true] %s188
          %194 = dma.hbm_to_vmem [thread:$0]  %s2, 2048, %s189, [#allocation7], 64, 64, 4
        $region20: #{tpu_custom_call.1} parent=11 // pred_fallthru
          _
        // Predicated region
        $region21: #{tpu_custom_call.1} parent=11 // pred_check
          %p195 = pneg %p112
        $region22: #{tpu_custom_call.1} parent=11 // pred_check_branch
          %197 = sbr.rel (%p195) target = $region24
        $region23: #{tpu_custom_call.1} parent=11 // pred_region
          _
        $region24: #{tpu_custom_call.1} parent=11 // pred_fallthru
          _
      $region12: #{tpu_custom_call.1} parent=5 // pred_fallthru
        _
      %p198 = scmp.lt.s32.totalorder %s23, 2
      // Predicated region
      $region25: #{tpu_custom_call.1} parent=5 // pred_check
        %p199 = pneg %p198
      $region26: #{tpu_custom_call.1} parent=5 // pred_check_branch
        %201 = sbr.rel (%p199) target = $region28
      $region27: #{tpu_custom_call.1} parent=5 // pred_region
        // Predicated region
        $region29: #{tpu_custom_call.1} parent=27 // pred_check
          %p202 = pneg %p64
        $region30: #{tpu_custom_call.1} parent=27 // pred_check_branch
          %204 = sbr.rel (%p202) target = $region32
        $region31: #{tpu_custom_call.1} parent=27 // pred_region
          %s205 = sand.u32 %s54, 1
          %s206 = scalar_lea.sflag [#allocation4], %s205
          %s207 = sand.u32 %s54, 1
          %s208 = smul.addr %s207, 64
          %s209 = scalar_lea.vmem [#allocation3], %s208
          %s210 = smul.u32 8, %s23
          %s212 = ssub.s32 1024, 1024
          %213 = vsyncadd %s206, %s212
          %s214 = smul.addr %s210, 2
          %s215 = smul.addr %s214, 64
          %s216 = scalar_lea.hbm %s1, %s215
          %s217 = sshll.u32 %s209, 4
          %s218 = int_to_ptr.vmem [resolvable:$true] %s217
          %223 = dma.hbm_to_vmem [thread:$0]  %s216, 1024, %s218, %s206, 128, 128, 8
        $region32: #{tpu_custom_call.1} parent=27 // pred_fallthru
          _
      $region28: #{tpu_custom_call.1} parent=5 // pred_fallthru
        _
      %p224 = scmp.le.s32.totalorder 1, %s23
      %p225 = scmp.lt.s32.totalorder %s23, 3
      %p226 = pnand %p224, %p225
      %p227 = pneg %p226
      // Predicated region
      $region33: #{tpu_custom_call.1} parent=5 // pred_check
        _
      $region34: #{tpu_custom_call.1} parent=5 // pred_check_branch
        %229 = sbr.rel (%p226) target = $region36
      $region35: #{tpu_custom_call.1} parent=5 // pred_region
        %s230 = ssub.s32 %s23, 1
        %s231 = sand.u32 %s57, 1
        %s232 = scalar_lea.sflag [#allocation4], %s231
        %s233 = sand.u32 %s57, 1
        %s234 = smul.addr %s233, 64
        %s235 = scalar_lea.vmem [#allocation3], %s234
        // Predicated region
        $region37: #{tpu_custom_call.1} parent=35 // pred_check
          %p236 = pneg %p70
        $region38: #{tpu_custom_call.1} parent=35 // pred_check_branch
          %238 = sbr.rel (%p236) target = $region40
        $region39: #{tpu_custom_call.1} parent=35 // pred_region
          %239 = dma.done %s232, 1024
        $region40: #{tpu_custom_call.1} parent=35 // pred_fallthru
          _
        // Predicated region
        $region41: #{tpu_custom_call.1} parent=35 // pred_check
          %p240 = pneg %p91
        $region42: #{tpu_custom_call.1} parent=35 // pred_check_branch
          %242 = sbr.rel (%p240) target = $region44
        $region43: #{tpu_custom_call.1} parent=35 // pred_region
          %243 = dma.done [#allocation7], 2048
        $region44: #{tpu_custom_call.1} parent=35 // pred_fallthru
          _
        %p244 = pneg %p44
        %p245 = pneg %p41
        %s246 = sand.u32 %s57, 1
        %s247 = scalar_lea.sflag [#allocation4], %s246
        %s248 = sand.u32 %s57, 1
        %s249 = smul.addr %s248, 64
        %s250 = scalar_lea.vmem [#allocation3], %s249
        %p251 = pneg %p70
        %p252 = pneg %p67
        %p253 = pneg %p91
        %p254 = pneg %p88
        %p255 = pneg %p112
        %p256 = pneg %p109
        %p257 = pneg %p138
        %p258 = pneg %p135
        %s259 = sand.u32 %s125, 1
        %s260 = scalar_lea.sflag [#allocation5], %s259
        %s261 = sand.u32 %s125, 1
        %s262 = smul.addr %s261, 64
        %s263 = scalar_lea.vmem [#allocation8], %s262
        %p264 = pneg %p164
        %p265 = pneg %p161
        %s266 = sand.u32 %s151, 1
        %s267 = scalar_lea.sflag [#allocation10], %s266
        %s268 = sand.u32 %s151, 1
        %s269 = scalar_lea.vmem [#allocation9], %s268
        %s270 = smul.u32 8, %s28
        %s271 = smul.u32 8, %s28
        %s273 = sld [smem:[#allocation2]]
        %v274 = vld [vmem:[%s235] sm:$0xff]
        %v275 = vld [vmem:[%s235 + $0x8] sm:$0xff]
        %v276 = vld [vmem:[%s235 + $0x10] sm:$0xff]
        %v277 = vld [vmem:[%s235 + $0x18] sm:$0xff]
        %v278 = vld [vmem:[%s235 + $0x20] sm:$0xff]
        %v279 = vld [vmem:[%s235 + $0x28] sm:$0xff]
        %v280 = vld [vmem:[%s235 + $0x30] sm:$0xff]
        %v281 = vld [vmem:[%s235 + $0x38] sm:$0xff]
        %v282 = vld [vmem:[#allocation6] sm:$0xf]
        %v283 = vld [vmem:[#allocation6 + $0x4] sm:$0xf]
        %v284 = vld [vmem:[#allocation6 + $0x8] sm:$0xf]
        %v285 = vld [vmem:[#allocation6 + $0xc] sm:$0xf]
        %v286 = vld [vmem:[#allocation6 + $0x10] sm:$0xf]
        %v287 = vld [vmem:[#allocation6 + $0x14] sm:$0xf]
        %v288 = vld [vmem:[#allocation6 + $0x18] sm:$0xf]
        %v289 = vld [vmem:[#allocation6 + $0x1c] sm:$0xf]
        %v290 = vld [vmem:[#allocation6 + $0x20] sm:$0xf]
        %v291 = vld [vmem:[#allocation6 + $0x24] sm:$0xf]
        %v292 = vld [vmem:[#allocation6 + $0x28] sm:$0xf]
        %v293 = vld [vmem:[#allocation6 + $0x2c] sm:$0xf]
        %v294 = vld [vmem:[#allocation6 + $0x30] sm:$0xf]
        %v295 = vld [vmem:[#allocation6 + $0x34] sm:$0xf]
        %v296 = vld [vmem:[#allocation6 + $0x38] sm:$0xf]
        %v297 = vld [vmem:[#allocation6 + $0x3c] sm:$0xf]
        %v298 = vld [vmem:[#allocation6 + $0x40] sm:$0xf]
        %v299 = vld [vmem:[#allocation6 + $0x44] sm:$0xf]
        %v300 = vld [vmem:[#allocation6 + $0x48] sm:$0xf]
        %v301 = vld [vmem:[#allocation6 + $0x4c] sm:$0xf]
        %v302 = vld [vmem:[#allocation6 + $0x50] sm:$0xf]
        %v303 = vld [vmem:[#allocation6 + $0x54] sm:$0xf]
        %v304 = vld [vmem:[#allocation6 + $0x58] sm:$0xf]
        %v305 = vld [vmem:[#allocation6 + $0x5c] sm:$0xf]
        %v306 = vld [vmem:[#allocation6 + $0x60] sm:$0xf]
        %v307 = vld [vmem:[#allocation6 + $0x64] sm:$0xf]
        %v308 = vld [vmem:[#allocation6 + $0x68] sm:$0xf]
        %v309 = vld [vmem:[#allocation6 + $0x6c] sm:$0xf]
        %v310 = vld [vmem:[#allocation6 + $0x70] sm:$0xf]
        %v311 = vld [vmem:[#allocation6 + $0x74] sm:$0xf]
        %v312 = vld [vmem:[#allocation6 + $0x78] sm:$0xf]
        %v313 = vld [vmem:[#allocation6 + $0x7c] sm:$0xf]
        %v322 = vunpack.c.l.b16 %v274
        %v323 = vunpack.c.h.b16 %v274
        %v324 = vunpack.c.l.b16 %v275
        %v325 = vunpack.c.h.b16 %v275
        %v326 = vunpack.c.l.b16 %v276
        %v327 = vunpack.c.h.b16 %v276
        %v328 = vunpack.c.l.b16 %v277
        %v329 = vunpack.c.h.b16 %v277
        %v330 = vunpack.c.l.b16 %v278
        %v331 = vunpack.c.h.b16 %v278
        %v332 = vunpack.c.l.b16 %v279
        %v333 = vunpack.c.h.b16 %v279
        %v334 = vunpack.c.l.b16 %v280
        %v335 = vunpack.c.h.b16 %v280
        %v336 = vunpack.c.l.b16 %v281
        %v337 = vunpack.c.h.b16 %v281
        %v338 = vpack.c.b16 %v324, %v322
        %v339 = vpack.c.b16 %v325, %v323
        %v340 = vpack.c.b16 %v328, %v326
        %v341 = vpack.c.b16 %v329, %v327
        %v342 = vpack.c.b16 %v332, %v330
        %v343 = vpack.c.b16 %v333, %v331
        %v344 = vpack.c.b16 %v336, %v334
        %v345 = vpack.c.b16 %v337, %v335
        %v386 = vunpack.c.l.b16 %v282
        %v387 = vunpack.c.l.b16 %v283
        %v388 = vunpack.c.l.b16 %v284
        %v389 = vunpack.c.l.b16 %v285
        %v390 = vunpack.c.l.b16 %v286
        %v391 = vunpack.c.l.b16 %v287
        %v392 = vunpack.c.l.b16 %v288
        %v393 = vunpack.c.l.b16 %v289
        %v394 = vunpack.c.l.b16 %v290
        %v395 = vunpack.c.l.b16 %v291
        %v396 = vunpack.c.l.b16 %v292
        %v397 = vunpack.c.l.b16 %v293
        %v398 = vunpack.c.l.b16 %v294
        %v399 = vunpack.c.l.b16 %v295
        %v400 = vunpack.c.l.b16 %v296
        %v401 = vunpack.c.l.b16 %v297
        %v402 = vunpack.c.l.b16 %v298
        %v403 = vunpack.c.l.b16 %v299
        %v404 = vunpack.c.l.b16 %v300
        %v405 = vunpack.c.l.b16 %v301
        %v406 = vunpack.c.l.b16 %v302
        %v407 = vunpack.c.l.b16 %v303
        %v408 = vunpack.c.l.b16 %v304
        %v409 = vunpack.c.l.b16 %v305
        %v410 = vunpack.c.l.b16 %v306
        %v411 = vunpack.c.l.b16 %v307
        %v412 = vunpack.c.l.b16 %v308
        %v413 = vunpack.c.l.b16 %v309
        %v414 = vunpack.c.l.b16 %v310
        %v415 = vunpack.c.l.b16 %v311
        %v416 = vunpack.c.l.b16 %v312
        %v417 = vunpack.c.l.b16 %v313
        %v418 = vpack.c.b16 %v387, %v386
        %v419 = vpack.c.b16 %v389, %v388
        %v420 = vpack.c.b16 %v391, %v390
        %v421 = vpack.c.b16 %v393, %v392
        %v422 = vpack.c.b16 %v395, %v394
        %v423 = vpack.c.b16 %v397, %v396
        %v424 = vpack.c.b16 %v399, %v398
        %v425 = vpack.c.b16 %v401, %v400
        %v426 = vpack.c.b16 %v403, %v402
        %v427 = vpack.c.b16 %v405, %v404
        %v428 = vpack.c.b16 %v407, %v406
        %v429 = vpack.c.b16 %v409, %v408
        %v430 = vpack.c.b16 %v411, %v410
        %v431 = vpack.c.b16 %v413, %v412
        %v432 = vpack.c.b16 %v415, %v414
        %v433 = vpack.c.b16 %v417, %v416
        %450 = vmatprep.subr.bf16.mxu0 0
        %451 = vmatpush1.bf16.msra.mxu0 %v418
        %452 = vmatprep.subr.bf16.mxu0 0
        %453 = vmatpush1.bf16.msra.mxu0 %v419
        %454 = vmatprep.subr.bf16.mxu0 0
        %455 = vmatpush1.bf16.msra.mxu0 %v420
        %456 = vmatprep.subr.bf16.mxu0 0
        %457 = vmatpush1.bf16.msra.mxu0 %v421
        %458 = vmatprep.subr.bf16.mxu0 0
        %459 = vmatpush1.bf16.msra.mxu0 %v422
        %460 = vmatprep.subr.bf16.mxu0 0
        %461 = vmatpush1.bf16.msra.mxu0 %v423
        %462 = vmatprep.subr.bf16.mxu0 0
        %463 = vmatpush1.bf16.msra.mxu0 %v424
        %464 = vmatprep.subr.bf16.mxu0 0
        %465 = vmatpush1.bf16.msra.mxu0 %v425
        %466 = vmatprep.subr.bf16.mxu0 0
        %467 = vmatpush1.bf16.msra.mxu0 %v426
        %468 = vmatprep.subr.bf16.mxu0 0
        %469 = vmatpush1.bf16.msra.mxu0 %v427
        %470 = vmatprep.subr.bf16.mxu0 0
        %471 = vmatpush1.bf16.msra.mxu0 %v428
        %472 = vmatprep.subr.bf16.mxu0 0
        %473 = vmatpush1.bf16.msra.mxu0 %v429
        %474 = vmatprep.subr.bf16.mxu0 0
        %475 = vmatpush1.bf16.msra.mxu0 %v430
        %476 = vmatprep.subr.bf16.mxu0 0
        %477 = vmatpush1.bf16.msra.mxu0 %v431
        %478 = vmatprep.subr.bf16.mxu0 0
        %479 = vmatpush1.bf16.msra.mxu0 %v432
        %480 = vmatprep.subr.bf16.mxu0 0
        %481 = vmatpush1.bf16.msra.mxu0 %v433
        %482 = vmatprep.mubr.bf16.mxu0 %v339
        %483 = vmatmul.mubr.bf16.gmra.mrb[0].mxu0 %v338
        %v484 = vpop.f32.mrb[0].mxu0
        %v485 = vadd.f32 0.0, %v484
        %v486 = vpop.f32.mrb[0].mxu0
        %v487 = vpop.f32.mrb[0].mxu0
        %v488 = vadd.f32 0.0, %v487
        %v489 = vpop.f32.mrb[0].mxu0
        %490 = vmatprep.mubr.bf16.mxu0 %v341
        %491 = vmatmul.mubr.bf16.gmra.mrb[0].mxu0 %v340
        %v492 = vpop.f32.mrb[0].mxu0
        %v493 = vadd.f32 0.0, %v492
        %v494 = vpop.f32.mrb[0].mxu0
        %v495 = vpop.f32.mrb[0].mxu0
        %v496 = vadd.f32 0.0, %v495
        %v497 = vpop.f32.mrb[0].mxu0
        %498 = vmatprep.mubr.bf16.mxu0 %v343
        %499 = vmatmul.mubr.bf16.gmra.mrb[0].mxu0 %v342
        %v500 = vpop.f32.mrb[0].mxu0
        %v501 = vadd.f32 0.0, %v500
        %v502 = vpop.f32.mrb[0].mxu0
        %v503 = vpop.f32.mrb[0].mxu0
        %v504 = vadd.f32 0.0, %v503
        %v505 = vpop.f32.mrb[0].mxu0
        %506 = vmatprep.mubr.bf16.mxu0 %v345
        %507 = vmatmul.mubr.bf16.gmra.mrb[0].mxu0 %v344
        %v508 = vpop.f32.mrb[0].mxu0
        %v509 = vadd.f32 0.0, %v508
        %v510 = vpop.f32.mrb[0].mxu0
        %v511 = vpop.f32.mrb[0].mxu0
        %v512 = vadd.f32 0.0, %v511
        %v513 = vpop.f32.mrb[0].mxu0
        %514 = vdwg.mxu0
        %v515 = vstv %s273
        %v516 = vmul.f32 %v485, %v515
        %v517 = vmul.f32 %v488, %v515
        %v518 = vmul.f32 %v493, %v515
        %v519 = vmul.f32 %v496, %v515
        %v520 = vmul.f32 %v501, %v515
        %v521 = vmul.f32 %v504, %v515
        %v522 = vmul.f32 %v509, %v515
        %v523 = vmul.f32 %v512, %v515
        %v524 = vld [vmem:[%s3] sm:$0x1]
        %v526 = vlaneseq
        %v527 = vshrl.u32 %v526, 7
        %v528 = vsub.s32 0, %v527
        %v529 = vrot.slane %v524, %v528
        %v531 = vadd.f32 %v516, %v529
        %v532 = vadd.f32 %v517, %v529
        %v533 = vadd.f32 %v518, %v529
        %v534 = vadd.f32 %v519, %v529
        %v535 = vadd.f32 %v520, %v529
        %v536 = vadd.f32 %v521, %v529
        %v537 = vadd.f32 %v522, %v529
        %v538 = vadd.f32 %v523, %v529
        %539 = vmax.xlane.f32.xlu0 %v531
        %v540 = vpop.xlane.xlu0 %539
        %541 = vmax.xlane.f32.xlu0 %v532
        %v542 = vpop.xlane.xlu0 %541
        %543 = vmax.xlane.f32.xlu0 %v533
        %v544 = vpop.xlane.xlu0 %543
        %545 = vmax.xlane.f32.xlu0 %v534
        %v546 = vpop.xlane.xlu0 %545
        %547 = vmax.xlane.f32.xlu0 %v535
        %v548 = vpop.xlane.xlu0 %547
        %549 = vmax.xlane.f32.xlu0 %v536
        %v550 = vpop.xlane.xlu0 %549
        %551 = vmax.xlane.f32.xlu0 %v537
        %v552 = vpop.xlane.xlu0 %551
        %553 = vmax.xlane.f32.xlu0 %v538
        %v554 = vpop.xlane.xlu0 %553
        %v555 = vsub.f32 %v531, %v540
        %v556 = vsub.f32 %v532, %v542
        %v557 = vsub.f32 %v533, %v544
        %v558 = vsub.f32 %v534, %v546
        %v559 = vsub.f32 %v535, %v548
        %v560 = vsub.f32 %v536, %v550
        %v561 = vsub.f32 %v537, %v552
        %v562 = vsub.f32 %v538, %v554
        %v563 = vmul.f32 %v555, 1.442695
        %v564 = vpow.pop %v563
        %v565 = vmul.f32 %v556, 1.442695
        %v566 = vpow.pop %v565
        %v567 = vmul.f32 %v557, 1.442695
        %v568 = vpow.pop %v567
        %v569 = vmul.f32 %v558, 1.442695
        %v570 = vpow.pop %v569
        %v571 = vmul.f32 %v559, 1.442695
        %v572 = vpow.pop %v571
        %v573 = vmul.f32 %v560, 1.442695
        %v574 = vpow.pop %v573
        %v575 = vmul.f32 %v561, 1.442695
        %v576 = vpow.pop %v575
        %v577 = vmul.f32 %v562, 1.442695
        %v578 = vpow.pop %v577
        %579 = vadd.xlane.f32.xlu0 %v564
        %v580 = vpop.xlane.xlu0 %579
        %581 = vadd.xlane.f32.xlu0 %v566
        %v582 = vpop.xlane.xlu0 %581
        %583 = vadd.xlane.f32.xlu0 %v568
        %v584 = vpop.xlane.xlu0 %583
        %585 = vadd.xlane.f32.xlu0 %v570
        %v586 = vpop.xlane.xlu0 %585
        %587 = vadd.xlane.f32.xlu0 %v572
        %v588 = vpop.xlane.xlu0 %587
        %589 = vadd.xlane.f32.xlu0 %v574
        %v590 = vpop.xlane.xlu0 %589
        %591 = vadd.xlane.f32.xlu0 %v576
        %v592 = vpop.xlane.xlu0 %591
        %593 = vadd.xlane.f32.xlu0 %v578
        %v594 = vpop.xlane.xlu0 %593
        %v595 = vrcp.pop %v580
        %v596 = vmul.f32 %v564, %v595
        %v597 = vrcp.pop %v582
        %v598 = vmul.f32 %v566, %v597
        %v599 = vrcp.pop %v584
        %v600 = vmul.f32 %v568, %v599
        %v601 = vrcp.pop %v586
        %v602 = vmul.f32 %v570, %v601
        %v603 = vrcp.pop %v588
        %v604 = vmul.f32 %v572, %v603
        %v605 = vrcp.pop %v590
        %v606 = vmul.f32 %v574, %v605
        %v607 = vrcp.pop %v592
        %v608 = vmul.f32 %v576, %v607
        %v609 = vrcp.pop %v594
        %v610 = vmul.f32 %v578, %v609
        %611 = vst [vmem:[%s263] sm:$0xff] %v596
        %612 = vst [vmem:[%s263 + $0x8] sm:$0xff] %v598
        %613 = vst [vmem:[%s263 + $0x10] sm:$0xff] %v600
        %614 = vst [vmem:[%s263 + $0x18] sm:$0xff] %v602
        %615 = vst [vmem:[%s263 + $0x20] sm:$0xff] %v604
        %616 = vst [vmem:[%s263 + $0x28] sm:$0xff] %v606
        %617 = vst [vmem:[%s263 + $0x30] sm:$0xff] %v608
        %618 = vst [vmem:[%s263 + $0x38] sm:$0xff] %v610
        %v619 = vadd.f32 %v596, %v598
        %v620 = vadd.f32 %v619, %v600
        %v621 = vadd.f32 %v620, %v602
        %v622 = vadd.f32 %v621, %v604
        %v623 = vadd.f32 %v622, %v606
        %v624 = vadd.f32 %v623, %v608
        %v625 = vadd.f32 %v624, %v610
        %v626 = vrot.slane %v625, 4
        %v627 = vadd.f32 %v625, %v626
        %v628 = vrot.slane %v627, 2
        %v629 = vadd.f32 %v627, %v628
        %v630 = vrot.slane %v629, 1
        %v631 = vadd.f32 %v629, %v630
        %632 = vst [vmem:[%s269] sm:$0x1] %v631
        %s633 = sand.u32 %s125, 1
        %s634 = scalar_lea.sflag [#allocation5], %s633
        %s635 = sand.u32 %s125, 1
        %s636 = smul.addr %s635, 64
        %s637 = scalar_lea.vmem [#allocation8], %s636
        %s638 = sand.u32 %s151, 1
        %s639 = scalar_lea.sflag [#allocation10], %s638
        %s640 = sand.u32 %s151, 1
        %s641 = scalar_lea.vmem [#allocation9], %s640
        // Predicated region
        $region45: #{tpu_custom_call.1} parent=35 // pred_check
          %p642 = pneg %p135
        $region46: #{tpu_custom_call.1} parent=35 // pred_check_branch
          %644 = sbr.rel (%p642) target = $region48
        $region47: #{tpu_custom_call.1} parent=35 // pred_region
          %s645 = smul.u32 8, %s28
          %s647 = ssub.s32 1024, 1024
          %648 = vsyncadd %s634, %s647
          %s649 = smul.addr %s645, 128
          %s650 = scalar_lea.hbm %s4, %s649
          %s651 = sshll.u32 %s637, 4
          %s652 = int_to_ptr.vmem [resolvable:$true] %s651
          %657 = dma.vmem_to_hbm [thread:$0]  %s652, 1024, %s650, %s634, 128, 128, 8
        $region48: #{tpu_custom_call.1} parent=35 // pred_fallthru
          _
        // Predicated region
        $region49: #{tpu_custom_call.1} parent=35 // pred_check
          %p658 = pneg %p161
        $region50: #{tpu_custom_call.1} parent=35 // pred_check_branch
          %660 = sbr.rel (%p658) target = $region52
        $region51: #{tpu_custom_call.1} parent=35 // pred_region
          %s662 = ssub.s32 16, 16
          %663 = vsyncadd %s639, %s662
          %s664 = smul.addr %s28, 16
          %s665 = scalar_lea.hbm %s5, %s664
          %s667 = sshll.u32 %s641, 4
          %s668 = int_to_ptr.vmem [resolvable:$true] %s667
          %670 = dma.vmem_to_hbm [thread:$0]  %s668, 16, %s665, %s639
        $region52: #{tpu_custom_call.1} parent=35 // pred_fallthru
          _
      $region36: #{tpu_custom_call.1} parent=5 // pred_fallthru
        _
      %p671 = scmp.le.s32.totalorder 2, %s23
      // Predicated region
      $region53: #{tpu_custom_call.1} parent=5 // pred_check
        %p672 = pneg %p671
      $region54: #{tpu_custom_call.1} parent=5 // pred_check_branch
        %674 = sbr.rel (%p672) target = $region56
      $region55: #{tpu_custom_call.1} parent=5 // pred_region
        %s675 = ssub.s32 %s23, 2
        // Predicated region
        $region57: #{tpu_custom_call.1} parent=55 // pred_check
          %p676 = pneg %p141
        $region58: #{tpu_custom_call.1} parent=55 // pred_check_branch
          %678 = sbr.rel (%p676) target = $region60
        $region59: #{tpu_custom_call.1} parent=55 // pred_region
          %s679 = sand.u32 %s126, 1
          %s680 = scalar_lea.sflag [#allocation5], %s679
          %s681 = sand.u32 %s126, 1
          %s682 = smul.addr %s681, 64
          %s683 = scalar_lea.vmem [#allocation8], %s682
          %684 = dma.done %s680, 1024
        $region60: #{tpu_custom_call.1} parent=55 // pred_fallthru
          _
        // Predicated region
        $region61: #{tpu_custom_call.1} parent=55 // pred_check
          %p685 = pneg %p167
        $region62: #{tpu_custom_call.1} parent=55 // pred_check_branch
          %687 = sbr.rel (%p685) target = $region64
        $region63: #{tpu_custom_call.1} parent=55 // pred_region
          %s688 = sand.u32 %s152, 1
          %s689 = scalar_lea.sflag [#allocation10], %s688
          %s690 = sand.u32 %s152, 1
          %s691 = scalar_lea.vmem [#allocation9], %s690
          %692 = dma.done %s689, 16
        $region64: #{tpu_custom_call.1} parent=55 // pred_fallthru
          _
      $region56: #{tpu_custom_call.1} parent=5 // pred_fallthru
        _
    $region6: #{tpu_custom_call.1} parent=1 // loop_footer
      %s27 = sadd.s32 1, %s23
    $region7: #{tpu_custom_call.1} parent=1 // loop_footer_branch
      %22 = sbr.rel target = $region3
    $region8: #{tpu_custom_call.1} parent=1 // loop_exit
      _
    %693 = vsyncpa [#allocation4], 1
    %s694 = scalar_lea.sflag [#allocation4], 1
    %695 = vsyncpa %s694, 1
    %696 = vsyncpa [#allocation7], 1
    %697 = vsyncpa [#allocation5], 1
    %s698 = scalar_lea.sflag [#allocation5], 1
    %699 = vsyncpa %s698, 1
    %700 = vsyncpa [#allocation10], 1
    %s701 = scalar_lea.sflag [#allocation10], 1
    %702 = vsyncpa %s701, 1

</llo_original>
